<compile_context>
chip_gen: v5e
topology: v5e:2x2
jax: 0.10.0
libtpu: 0.0.40
codegen_flags: <defaults>
</compile_context>

<pallas_src>
import functools
import math

import jax
import jax.numpy as jnp
from jax.experimental import pallas as pl
from jax.experimental.pallas import tpu as pltpu


def _rmsnorm_kernel(x_ref, w_ref, o_ref, *, eps, inv_dim, cast_to_x_dtype):
    # x_ref: (tm, D) input tile, w_ref: (1, D) weight (VMEM-resident), o_ref: (tm, D).
    x = x_ref[...].astype(jnp.float32)                        # x.float()
    # sum * (1/D): reduction on the XLU slot, the mean folds to one VPU mul.
    ms = jnp.sum(x * x, axis=-1, keepdims=True) * inv_dim     # x.pow(2).mean(-1, keepdim=True)
    normed = x * jax.lax.rsqrt(ms + eps)                      # rsqrt on the EUP slot
    if cast_to_x_dtype:
        normed = normed.astype(x_ref.dtype)                   # .type_as(x)  (PyTorch rounding)
    o_ref[...] = (normed * w_ref[...]).astype(o_ref.dtype)    # output * self.weight


def _ceil_div(a, b):
    return -(-a // b)


def _sublane_multiple(*dtypes):
    # Rows per full (sublane, 128) vreg: f32 -> 8, bf16 -> 16, int8/fp8 -> 32.
    min_bytes = min(jnp.dtype(d).itemsize for d in dtypes)
    return max(8, 32 // max(min_bytes, 1))


def _vmem_capacity_bytes():
    try:
        return int(pltpu.get_tpu_info().vmem_capacity_bytes)
    except Exception:
        pass
    # Fallback: infer from the device kind instead of blindly halving the
    # budget on v5e/v6e (128 MiB parts).
    try:
        kind = jax.devices()[0].device_kind.lower()
        if "v7" in kind:
            return 64 << 20
        return 128 << 20
    except Exception:
        return 64 << 20  # conservative default (v7x per-TensorCore capacity)


def _even_grid(rows, tm, sub):
    """Nudge tm so the parallel grid length is even (balanced across the two
    TensorCores of a v7x megacore).  No-op for single-block grids."""
    steps = _ceil_div(rows, tm)
    if steps <= 1 or steps % 2 == 0:
        return tm
    for target_steps in (steps + 1, steps + 3):
        cand = max(sub, _ceil_div(_ceil_div(rows, target_steps), sub) * sub)
        if cand < rows and _ceil_div(rows, cand) % 2 == 0:
            return cand
    return tm


def _tile_config(rows, dim, x_dtype, out_dtype, block_rows=None):
    """Pick the row-tile size and a matching scoped-VMEM limit."""
    x_b = jnp.dtype(x_dtype).itemsize
    o_b = jnp.dtype(out_dtype).itemsize
    sub = _sublane_multiple(x_dtype, out_dtype)
    vmem_cap = _vmem_capacity_bytes()

    # Per-row VMEM cost:
    #   2x double-buffered input tile + 2x double-buffered output tile
    #   (BlockSpec auto-pipelining) + ~12 B/elem for the in-kernel f32 working
    #   set (f32 copy of x + temporaries, all live until the row reduction and
    #   the normalize/scale pass finish).
    per_row = dim * (2 * x_b + 2 * o_b + 12)

    if block_rows is None:
        # Byte-based target: ~4 MiB of input per block keeps the ~0.35 us
        # per-grid-step overhead negligible for any hidden dim.
        target_in_bytes = 4 << 20
        tm_bytes = max(1, target_in_bytes // (dim * x_b))
        # Keep the total working set within ~1/3 of physical VMEM.
        tm_vmem = max(1, (vmem_cap // 3) // per_row)
        tm = min(tm_bytes, tm_vmem)
    else:
        tm = int(block_rows)

    if tm >= rows:
        tm = rows                                  # single full block (no (8,128) constraint)
    else:
        tm = max(sub, (tm // sub) * sub)           # second-to-last dim: sublane multiple
        tm = min(tm, rows)
        if block_rows is None:
            tm = _even_grid(rows, tm, sub)         # even grid for v7x core balance

    working = per_row * tm + dim * 4 * 2           # + resident weight buffers
    # Leave >= 8 MiB of true slack below physical capacity (v7x: 64 MiB) so the
    # 2-deep pipeline never loses its double-buffering.
    vmem_limit = int(min(vmem_cap - (8 << 20), working + (16 << 20)))
    vmem_limit = max(vmem_limit, 16 << 20)
    return tm, vmem_limit


def rmsnorm(x, weight, eps=1e-6, *, out_dtype=None, match_torch_promotion=False,
            exact_typeas=True, block_rows=None):
    """RMSNorm over the last axis of x, matching the PyTorch module's forward.

    Output dtype defaults to x.dtype (the HBM-traffic fast path).  Pass
    `match_torch_promotion=True` (or an explicit `out_dtype`) to reproduce the
    PyTorch promotion of `output.type_as(x) * weight` (e.g. f32 output for
    bf16 x with an f32 weight) at the cost of a wider output write.
    `exact_typeas=False` skips the intermediate downcast to x.dtype before the
    weight multiply (micro-opt; diverges from PyTorch's `.type_as(x)` rounding).
    """
    orig_shape = x.shape
    dim = orig_shape[-1]
    assert weight.shape == (dim,)

    rows = math.prod(orig_shape[:-1])
    x2 = x.reshape(rows, dim)
    w2 = weight.reshape(1, dim)

    if out_dtype is None:
        out_dtype = (jnp.result_type(x.dtype, weight.dtype)
                     if match_torch_promotion else x.dtype)

    tm, vmem_limit = _tile_config(rows, dim, x.dtype, out_dtype, block_rows)
    grid = (pl.cdiv(rows, tm),)   # ragged tail handled by Pallas block masking

    kernel = functools.partial(_rmsnorm_kernel, eps=float(eps), inv_dim=1.0 / dim,
                               cast_to_x_dtype=bool(exact_typeas))

    out = pl.pallas_call(
        kernel,
        out_shape=jax.ShapeDtypeStruct((rows, dim), out_dtype),
        grid_spec=pltpu.PrefetchScalarGridSpec(
            num_scalar_prefetch=0,
            grid=grid,
            in_specs=[
                pl.BlockSpec((tm, dim), lambda i: (i, 0)),   # x tile (dim on lane axis)
                pl.BlockSpec((1, dim), lambda i: (0, 0)),    # weight, resident in VMEM
            ],
            out_specs=pl.BlockSpec((tm, dim), lambda i: (i, 0)),
        ),
        compiler_params=pltpu.CompilerParams(
            dimension_semantics=("parallel",),
            vmem_limit_bytes=vmem_limit,
        ),
    )(x2, w2)

    return out.reshape(orig_shape)


def rmsnorm_reference(x, weight, eps=1e-6):
    # Exact PyTorch forward: norm in f32, cast to x.dtype, multiply by weight
    # (result dtype follows x.dtype * weight.dtype promotion).
    xf = x.astype(jnp.float32)
    normed = (xf * jax.lax.rsqrt(jnp.mean(xf * xf, axis=-1, keepdims=True) + eps)).astype(x.dtype)
    return normed * weight


if __name__ == "__main__":
    key = jax.random.PRNGKey(0)
    k1, k2, k3 = jax.random.split(key, 3)

    # 1) f32, ragged row count (2*7 = 14 rows), lane-aligned hidden dim.
    batch, seq, hidden = 2, 7, 128
    x = jax.random.normal(k1, (batch, seq, hidden), dtype=jnp.float32)
    weight = jnp.ones((hidden,), dtype=jnp.float32)  # module init: torch.ones(dim)
    out = jax.block_until_ready(rmsnorm(x, weight, eps=1e-6))
    ref = rmsnorm_reference(x, weight, eps=1e-6)
    assert out.shape == x.shape and out.dtype == ref.dtype
    assert jnp.allclose(out, ref, atol=1e-5, rtol=1e-5)

    # 2) bf16 fast path: bf16 activations + f32 weight -> bf16 output (default).
    xb = jax.random.normal(k2, (2, 8, 256), dtype=jnp.bfloat16)
    wb = (1.0 + 0.01 * jax.random.normal(k3, (256,), dtype=jnp.float32))
    outb = jax.block_until_ready(rmsnorm(xb, wb, eps=1e-6))
    assert outb.shape == xb.shape and outb.dtype == jnp.bfloat16
    refb = rmsnorm_reference(xb, wb, eps=1e-6).astype(jnp.bfloat16)
    assert jnp.allclose(outb.astype(jnp.float32), refb.astype(jnp.float32),
                        atol=2e-2, rtol=2e-2)

    # 3) exact PyTorch promotion (f32 output) behind the flag.
    outp = jax.block_until_ready(rmsnorm(xb, wb, eps=1e-6, match_torch_promotion=True))
    refp = rmsnorm_reference(xb, wb, eps=1e-6)
    assert outp.dtype == refp.dtype == jnp.float32
    assert jnp.allclose(outp, refp, atol=2e-2, rtol=2e-2)

    # 4) multi-block grid + ragged tail tile (forced small block for coverage).
    xm = jax.random.normal(k1, (4, 64, 128), dtype=jnp.float32)
    outm = jax.block_until_ready(rmsnorm(xm, weight, eps=1e-6, block_rows=96))
    refm = rmsnorm_reference(xm, weight, eps=1e-6)
    assert jnp.allclose(outm, refm, atol=1e-5, rtol=1e-5)

    print("KERNEL_OK")
</pallas_src>

<mosaic_0001>
module attributes {stable_mosaic.version = 11 : i64} {
  func.func @_rmsnorm_kernel(%arg0: i32, %arg1: memref<14x128xf32, #tpu.memory_space<vmem>>, %arg2: memref<1x128xf32, #tpu.memory_space<vmem>>, %arg3: memref<14x128xf32, #tpu.memory_space<vmem>>) attributes {dimension_semantics = [#tpu.dimension_semantics<parallel>], iteration_bounds = array<i64: 1>, scalar_prefetch = 0 : i64, scratch_operands = 0 : i64, tpu.core_type = #tpu.core_type<tc>, window_params = [{transform_indices = @transform_0, window_bounds = array<i64: 14, 128>}, {pipeline_mode = #tpu.pipeline_mode<synchronous>, transform_indices = @transform_1, window_bounds = array<i64: 1, 128>}, {transform_indices = @transform_2, window_bounds = array<i64: 14, 128>}]} {
    %c0 = arith.constant 0 : index
    %c0_0 = arith.constant 0 : index
    %0 = vector.load %arg1[%c0, %c0_0] : memref<14x128xf32, #tpu.memory_space<vmem>>, vector<14x128xf32>
    %1 = arith.mulf %0, %0 : vector<14x128xf32>
    %cst = arith.constant dense<0.000000e+00> : vector<14xf32>
    %2 = vector.multi_reduction <add>, %1, %cst [1] : vector<14x128xf32> to vector<14xf32>
    %3 = vector.shape_cast %2 : vector<14xf32> to vector<14x1xf32>
    %cst_1 = arith.constant 7.812500e-03 : f32
    %4 = vector.broadcast %cst_1 : f32 to vector<14x1xf32>
    %5 = arith.mulf %3, %4 : vector<14x1xf32>
    %cst_2 = arith.constant 9.99999997E-7 : f32
    %6 = vector.broadcast %cst_2 : f32 to vector<14x1xf32>
    %7 = arith.addf %5, %6 : vector<14x1xf32>
    %8 = math.rsqrt %7 : vector<14x1xf32>
    %9 = vector.broadcast %8 : vector<14x1xf32> to vector<14x128xf32>
    %10 = arith.mulf %0, %9 : vector<14x128xf32>
    %c0_3 = arith.constant 0 : index
    %c0_4 = arith.constant 0 : index
    %11 = vector.load %arg2[%c0_3, %c0_4] : memref<1x128xf32, #tpu.memory_space<vmem>>, vector<1x128xf32>
    %12 = vector.broadcast %11 : vector<1x128xf32> to vector<14x128xf32>
    %13 = arith.mulf %10, %12 : vector<14x128xf32>
    %c0_5 = arith.constant 0 : index
    %c0_6 = arith.constant 0 : index
    %14 = vector.load %arg3[%c0_5, %c0_6] : memref<14x128xf32, #tpu.memory_space<vmem>>, vector<14x128xf32>
    tpu.vector_store %arg3[%c0_5, %c0_6], %13 {strides = array<i32>} : memref<14x128xf32, #tpu.memory_space<vmem>>, vector<14x128xf32>,
    return
  }
  func.func @transform_0(%arg0: i32) -> (i32, i32) {
    %c0_i32 = arith.constant 0 : i32
    %c0_i32_0 = arith.constant 0 : i32
    return %arg0, %c0_i32 : i32, i32
  }
  func.func @transform_1(%arg0: i32) -> (i32, i32) {
    %c0_i32 = arith.constant 0 : i32
    %c0_i32_0 = arith.constant 0 : i32
    %c0_i32_1 = arith.constant 0 : i32
    return %c0_i32, %c0_i32_0 : i32, i32
  }
  func.func @transform_2(%arg0: i32) -> (i32, i32) {
    %c0_i32 = arith.constant 0 : i32
    %c0_i32_0 = arith.constant 0 : i32
    return %arg0, %c0_i32 : i32, i32
  }
}

</mosaic_0001>

<llo_original>
// kernel: tpu_custom_call.1
$region0: #{tpu_custom_call.1}
  #allocation0 [shape = 'u32[]', space=smem, size = 0x4, offset = 0x4, fixed_abs, tag = 'smem constant byte address 0x4 - core index']
  #allocation1 [shape = 'u32[72,128]{1,0:T(1,128)}', space=vmem, size = 0x9000, scoped, tag = 'internal scratch']
  %s0 = inlined_call_operand.hbm [shape: f32[14,128], index: 0, kind: input, shape index: {}]
  %s1 = inlined_call_operand.hbm [shape: f32[1,128], index: 1, kind: input, shape index: {}]
  %s2 = inlined_call_operand.hbm [shape: f32[14,128], index: 2, kind: output, shape index: {}]
  %s3 = sld [smem:[#allocation0]]
  $region26: #{tpu_custom_call.1} parent=0
    _
  %s5 = ssub.s32 1, %s3
  %s6 = scalar_select 0, %s5, %s3
  $region1: #{tpu_custom_call.1} parent=0
    #allocation2 [shape = 'u8[8192]{0}', space=vmem, size = 0x2000, scoped, tag = 'input window, operand 0, single buffered']
    #allocation3 [shape = 's32[1]{0}', space=sflag, size = 0x4, scoped, tag = 'scoped memory for tpu_custom_call.1']
    #allocation4 [shape = 's32[1]{0}', space=sflag, size = 0x4, scoped, tag = 'scoped memory for tpu_custom_call.1']
    #allocation5 [shape = 'u8[512]{0}', space=vmem, size = 0x400, scoped, tag = 'input window, operand 1, single buffered']
    #allocation6 [shape = 's32[1]{0}', space=sflag, size = 0x4, scoped, tag = 'scoped memory for tpu_custom_call.1']
    #allocation7 [shape = 'u8[8192]{0}', space=vmem, size = 0x2000, scoped, tag = 'output window, operand 0, single buffered']
    %7 = vsyncpa [#allocation3], 0
    %8 = vsyncpa [#allocation6], 0
    %9 = vsyncpa [#allocation4], 0
    // Predicated region
    $region2: #{tpu_custom_call.1} parent=1 // pred_check
      _
    $region3: #{tpu_custom_call.1} parent=1 // pred_check_branch
      %11 = sbr.rel (0) target = $region5
    $region4: #{tpu_custom_call.1} parent=1 // pred_region
      %13 = vsyncadd [#allocation3], 0
      %s14 = sshll.u32 %s0, 4
      %s15 = int_to_ptr.hbm [resolvable:$true] %s14
      %s16 = sshll.u32 [#allocation2], 4
      %s17 = int_to_ptr.vmem [resolvable:$true] %s16
      %22 = dma.hbm_to_vmem [thread:$0]  %s15, 256, %s17, [#allocation3], 128, 128, 8
    $region5: #{tpu_custom_call.1} parent=1 // pred_fallthru
      _
    // Predicated region
    $region6: #{tpu_custom_call.1} parent=1 // pred_check
      _
    $region7: #{tpu_custom_call.1} parent=1 // pred_check_branch
      %24 = sbr.rel (0) target = $region9
    $region8: #{tpu_custom_call.1} parent=1 // pred_region
      %26 = vsyncadd [#allocation6], 0
      %s28 = sshll.u32 %s1, 4
      %s29 = int_to_ptr.hbm [resolvable:$true] %s28
      %s30 = sshll.u32 [#allocation5], 4
      %s31 = int_to_ptr.vmem [resolvable:$true] %s30
      %33 = dma.hbm_to_vmem [thread:$0]  %s29, 16, %s31, [#allocation6]
    $region9: #{tpu_custom_call.1} parent=1 // pred_fallthru
      _
    // Predicated region
    $region10: #{tpu_custom_call.1} parent=1 // pred_check
      _
    $region11: #{tpu_custom_call.1} parent=1 // pred_check_branch
      %35 = sbr.rel (0) target = $region13
    $region12: #{tpu_custom_call.1} parent=1 // pred_region
      %37 = dma.done [#allocation3], 256
    $region13: #{tpu_custom_call.1} parent=1 // pred_fallthru
      _
    // Predicated region
    $region14: #{tpu_custom_call.1} parent=1 // pred_check
      _
    $region15: #{tpu_custom_call.1} parent=1 // pred_check_branch
      %39 = sbr.rel (0) target = $region17
    $region16: #{tpu_custom_call.1} parent=1 // pred_region
      %41 = dma.done [#allocation6], 16
    $region17: #{tpu_custom_call.1} parent=1 // pred_fallthru
      _
    %v42 = vld [vmem:[#allocation2] sm:$0xff]
    %v43 = vld [vmem:[#allocation2 + $0x8] sm:$0x3f]
    %v44 = vmul.f32 %v42, %v42
    %v45 = vmul.f32 %v43, %v43
    %46 = vadd.xlane.f32.xlu0 %v44
    %v47 = vpop.xlane.xlu0 %46
    %vm48 = vcmask 1045504
    %v49 = vsel %vm48, %v45, 0.0
    %50 = vadd.xlane.f32.xlu0 %v49
    %v51 = vpop.xlane.xlu0 %50
    %v52 = vmul.f32 %v47, 0.0078125
    %v53 = vmul.f32 %v51, 0.0078125
    %v54 = vadd.f32 %v52, 1e-06
    %v55 = vadd.f32 %v53, 1e-06
    %v56 = vrsqrt.pop %v54
    %v57 = vmul.f32 %v56, %v54
    %v58 = vmul.f32 %v57, %v56
    %v59 = vmul.f32 0.5, %v58
    %v60 = vsub.f32 1.5, %v59
    %v61 = vmul.f32 %v56, %v60
    %vm62 = vweird.f32 %v54
    %vm63 = vweird.f32 %v56
    %vm64 = vmor %vm62, %vm63
    %v65 = vsel %vm64, %v56, %v61
    %v66 = vrsqrt.pop %v55
    %v67 = vmul.f32 %v66, %v55
    %v68 = vmul.f32 %v67, %v66
    %v69 = vmul.f32 0.5, %v68
    %v70 = vsub.f32 1.5, %v69
    %v71 = vmul.f32 %v66, %v70
    %vm72 = vweird.f32 %v55
    %vm73 = vweird.f32 %v66
    %vm74 = vmor %vm72, %vm73
    %v75 = vsel %vm74, %v66, %v71
    %v76 = vmul.f32 %v42, %v65
    %v77 = vmul.f32 %v43, %v75
    %v78 = vld [vmem:[#allocation5] sm:$0x1]
    %v80 = vperm.slane %v78, 0
    %v82 = vmul.f32 %v76, %v80
    %v83 = vmul.f32 %v77, %v80
    %84 = vst [vmem:[#allocation7] sm:$0xff] %v82
    %85 = vst [vmem:[#allocation7 + $0x8] sm:$0x3f] %v83
    // Predicated region
    $region18: #{tpu_custom_call.1} parent=1 // pred_check
      _
    $region19: #{tpu_custom_call.1} parent=1 // pred_check_branch
      %87 = sbr.rel (0) target = $region21
    $region20: #{tpu_custom_call.1} parent=1 // pred_region
      %89 = vsyncadd [#allocation4], 0
      %s90 = sshll.u32 [#allocation7], 4
      %s91 = int_to_ptr.vmem [resolvable:$true] %s90
      %s92 = sshll.u32 %s2, 4
      %s93 = int_to_ptr.hbm [resolvable:$true] %s92
      %98 = dma.vmem_to_hbm [thread:$0]  %s91, 256, %s93, [#allocation4], 128, 128, 8
    $region21: #{tpu_custom_call.1} parent=1 // pred_fallthru
      _
    // Predicated region
    $region22: #{tpu_custom_call.1} parent=1 // pred_check
      _
    $region23: #{tpu_custom_call.1} parent=1 // pred_check_branch
      %100 = sbr.rel (0) target = $region25
    $region24: #{tpu_custom_call.1} parent=1 // pred_region
      %102 = dma.done [#allocation4], 256
    $region25: #{tpu_custom_call.1} parent=1 // pred_fallthru
      _
    %103 = vsyncpa [#allocation3], 1
    %104 = vsyncpa [#allocation6], 1
    %105 = vsyncpa [#allocation4], 1

</llo_original>
